<compile_context>
chip_gen: v7x
topology: tpu7x:2x2x1
jax: 0.10.0
libtpu: 0.0.40
codegen_flags: <defaults>
</compile_context>

<pallas_src>
import functools

import jax
import jax.numpy as jnp
from jax.experimental import pallas as pl
from jax.experimental.pallas import tpu as pltpu


def _round_up(a, m):
    return (a + m - 1) // m * m


def _accuracy_kernel(x_ref, w_ref, b_ref, t_ref, out_ref, acc_ref, *,
                     top_k, tiles_per_chunk):
    i = pl.program_id(1)          # tile within chunk (sequential reduction axis)

    @pl.when(i == 0)
    def _():
        acc_ref[...] = jnp.zeros_like(acc_ref)

    # --- model forward (hot path): linear classifier on the MXU, f32 accumulate ---
    logits = jnp.dot(x_ref[...], w_ref[...], preferred_element_type=jnp.float32)
    logits = logits + b_ref[...]                                        # (TB, C) f32

    # --- top-k correctness per row ---
    # A sample is "correct" iff fewer than k classes score strictly higher than
    # its target class (ties at the k-th boundary count as correct; only differs
    # from torch.topk for exactly-equal float logits). Padded rows carry the
    # out-of-range sentinel target class C, so their masked max is -inf and
    # they can never be counted correct -- no per-step masking needed.
    class_ids = jax.lax.broadcasted_iota(jnp.int32, logits.shape, 1)    # (TB, C)
    tgt_score = jnp.max(jnp.where(class_ids == t_ref[...], logits, -jnp.inf),
                        axis=-1, keepdims=True)                         # (TB, 1)
    n_above = jnp.sum((logits > tgt_score).astype(jnp.int32),
                      axis=-1, keepdims=True)                           # (TB, 1) i32
    correct = (n_above < top_k).astype(jnp.float32)                     # (TB, 1)

    # Single per-step scalar accumulate into a (1,1) scratch
    # (no (TB,1) column read-modify-write hammering the store slot / vregs).
    acc_ref[...] = acc_ref[...] + jnp.sum(correct)

    @pl.when(i == tiles_per_chunk - 1)
    def _():
        # One lane-dense write per chunk with the chunk's correct-count.
        out_ref[...] = jnp.full(out_ref.shape, jnp.sum(acc_ref[...]),
                                dtype=jnp.float32)


def classif_accuracy(x, w, b, targets, *, top_k=None, tile_b=None):
    """Fused (linear model forward + top-k multiclass accuracy). Returns scalar f32.

    x: (N, D), w: (D, C), b: (C,) / (1, C), targets: (N,) integer class ids.
    x and w are streamed in their native dtype (pass bf16 to halve HBM traffic;
    never cast here -- a wrapper-side cast is an extra un-hidden HBM pass).

    tile_b=None auto-sizes the batch tile from DMA granularity (>= ~1 MiB x tile)
    within a per-generation VMEM budget.
    """
    # TODO(synk): this computes micro accuracy (correct/N); recent torchmetrics
    # defaults multiclass Accuracy to average='macro' (per-class recall mean).
    if top_k is None:
        top_k = 1  # "top_k is None: Using top-1 accuracy as default"
    n, d = x.shape
    c_classes = w.shape[-1]

    x_isz = jnp.dtype(x.dtype).itemsize
    w_isz = jnp.dtype(w.dtype).itemsize

    # --- per-generation VMEM budget (v7x: 64 MiB/TC -> ~48 MiB usable; v5e/v6e:
    #     128 MiB -> up to ~100 MiB) ---
    try:
        vmem_cap = int(pltpu.get_tpu_info().vmem_capacity_bytes)
    except Exception:
        vmem_cap = 64 * 1024 * 1024           # conservative (v7x per-TC) fallback
    vmem_budget = int(min(vmem_cap - 16 * 1024 * 1024, 100 * 1024 * 1024))
    vmem_budget = max(vmem_budget, 32 * 1024 * 1024)

    # Sublane multiple for the streamed dtype (8 for f32, 16 for bf16, 32 for int8).
    sublane_mult = 8 * max(1, 4 // x_isz)

    # Fixed VMEM (W + b, budgeted double just in case single-buffering falls back,
    # plus output blocks); per-row streamed/working bytes (x double-buffer,
    # targets double-buffer, f32 logits working set).
    # NOTE: for a vocab-sized head, tile the class dimension instead of keeping W
    # resident (two sweeps over C, or a running top-k) -- not needed at these shapes.
    fixed_bytes = 2 * d * c_classes * w_isz + 4 * c_classes * 4 + 2 * 8 * 128 * 4
    row_bytes = 2 * d * x_isz + 2 * 4 + 12 * c_classes
    avail = max(vmem_budget - fixed_bytes - (4 << 20), row_bytes * sublane_mult)
    tile_b_max = max(sublane_mult,
                     (avail // row_bytes) // sublane_mult * sublane_mult)

    # Size the batch tile from DMA granularity: aim for >= ~1 MiB x tiles
    # (per-step overhead ~0.35 us dominates small tiles when D is small).
    n_pad0 = _round_up(max(n, 1), sublane_mult)
    if tile_b is None:
        tile_b_req = -(-(1 << 20) // (d * x_isz))     # rows for a ~1 MiB x tile
    else:
        tile_b_req = int(tile_b)
    tile_b_eff = max(sublane_mult, min(tile_b_req, tile_b_max, n_pad0))
    tile_b_eff = _round_up(tile_b_eff, sublane_mult)

    n_pad = _round_up(n, tile_b_eff)
    n_tiles = n_pad // tile_b_eff
    # Guarantee an even tile count whenever multi-tile so v7x's 2 TensorCores both
    # get a chunk (the extra all-padded tile is harmless: sentinel targets never count).
    if n_tiles >= 2 and n_tiles % 2 == 1:
        n_tiles += 1
        n_pad = n_tiles * tile_b_eff
    n_chunks = 2 if n_tiles >= 2 else 1
    tiles_per_chunk = n_tiles // n_chunks

    # Pad batch; padded targets get the out-of-range sentinel class C.
    if n_pad != n:
        x = jnp.pad(x, ((0, n_pad - n), (0, 0)))
    t_flat = jnp.reshape(targets, (-1,)).astype(jnp.int32)
    if n_pad != n:
        t_flat = jnp.pad(t_flat, (0, n_pad - n), constant_values=c_classes)
    t2 = jnp.reshape(t_flat, (n_pad, 1))
    b2 = jnp.reshape(b, (1, c_classes)).astype(jnp.float32)   # tiny; added onto f32 logits

    kernel = functools.partial(_accuracy_kernel, top_k=int(top_k),
                               tiles_per_chunk=tiles_per_chunk)

    def build(single_buffer_consts):
        const_kw = {"pipeline_mode": pl.Buffered(1)} if single_buffer_consts else {}
        grid_spec = pltpu.PrefetchScalarGridSpec(
            num_scalar_prefetch=0,
            grid=(n_chunks, tiles_per_chunk),
            in_specs=[
                pl.BlockSpec((tile_b_eff, d),
                             lambda c, i: (c * tiles_per_chunk + i, 0)),        # x tile
                pl.BlockSpec((d, c_classes), lambda c, i: (0, 0), **const_kw),  # W resident
                pl.BlockSpec((1, c_classes), lambda c, i: (0, 0), **const_kw),  # b resident
                pl.BlockSpec((tile_b_eff, 1),
                             lambda c, i: (c * tiles_per_chunk + i, 0)),        # targets
            ],
            out_specs=pl.BlockSpec((1, 8, 128), lambda c, i: (c, 0, 0)),        # per-chunk count
            scratch_shapes=[pltpu.VMEM((1, 1), jnp.float32)],
        )
        return pl.pallas_call(
            kernel,
            out_shape=jax.ShapeDtypeStruct((n_chunks, 8, 128), jnp.float32),
            grid_spec=grid_spec,
            compiler_params=pltpu.CompilerParams(
                dimension_semantics=("parallel", "arbitrary"),
                vmem_limit_bytes=vmem_budget),
        )

    try:
        partials = build(True)(x, w, b2, t2)
    except Exception:
        # Fallback for environments where single-buffer pipeline_mode is rejected.
        partials = build(False)(x, w, b2, t2)

    # Per-chunk correct-counts live at [:, 0, 0]; final mean in plain JAX.
    return jnp.sum(partials[:, 0, 0]) / float(n)


if __name__ == "__main__":
    # Small shapes consistent with the module: batch=64, hidden=32, num_classes=16.
    N, D, C = 64, 32, 16

    key = jax.random.PRNGKey(0)
    k_x, k_w, k_b, k_t = jax.random.split(key, 4)

    x = jax.random.normal(k_x, (N, D), dtype=jnp.float32)
    # Deterministic synthetic "model" parameters (linear classifier D -> C).
    w = jax.random.normal(k_w, (D, C), dtype=jnp.float32) * 0.1
    b = jax.random.normal(k_b, (C,), dtype=jnp.float32) * 0.1
    targets = jax.random.randint(k_t, (N,), 0, C, dtype=jnp.int32)

    logits_ref = x @ w + b

    # top-1 accuracy (top_k=None default), auto-sized tile (whole batch in one tile).
    acc1 = jax.block_until_ready(classif_accuracy(x, w, b, targets, top_k=None))
    ref1 = jnp.mean((jnp.argmax(logits_ref, axis=-1) == targets).astype(jnp.float32))
    assert abs(float(acc1) - float(ref1)) < 1e-6, (float(acc1), float(ref1))

    # top-3 accuracy.
    acc3 = jax.block_until_ready(classif_accuracy(x, w, b, targets, top_k=3))
    _, top3 = jax.lax.top_k(logits_ref, 3)
    ref3 = jnp.mean(jnp.any(top3 == targets[:, None], axis=-1).astype(jnp.float32))
    assert abs(float(acc3) - float(ref3)) < 1e-6, (float(acc3), float(ref3))

    # Ragged batch: exercises sentinel-target padding + multi-tile + parallel chunk axis.
    Nr = 50
    accr = jax.block_until_ready(
        classif_accuracy(x[:Nr], w, b, targets[:Nr], top_k=None, tile_b=16))
    refr = jnp.mean((jnp.argmax(logits_ref[:Nr], axis=-1)
                     == targets[:Nr]).astype(jnp.float32))
    assert abs(float(accr) - float(refr)) < 1e-6, (float(accr), float(refr))

    print("KERNEL_OK")
</pallas_src>

<mosaic_0001>
module attributes {stable_mosaic.version = 11 : i64} {
  func.func @_accuracy_kernel(%arg0: i32, %arg1: i32, %arg2: memref<64x32xf32, #tpu.memory_space<vmem>>, %arg3: memref<32x16xf32, #tpu.memory_space<vmem>>, %arg4: memref<1x16xf32, #tpu.memory_space<vmem>>, %arg5: memref<64x1xi32, #tpu.memory_space<vmem>>, %arg6: memref<1x8x128xf32, #tpu.memory_space<vmem>>, %arg7: memref<1x1xf32, #tpu.memory_space<vmem>>) attributes {dimension_semantics = [#tpu.dimension_semantics<parallel>, #tpu.dimension_semantics<arbitrary>], iteration_bounds = array<i64: 1, 1>, scalar_prefetch = 0 : i64, scratch_operands = 1 : i64, tpu.core_type = #tpu.core_type<tc>, window_params = [{transform_indices = @transform_0, window_bounds = array<i64: 64, 32>}, {pipeline_mode = #tpu.pipeline_mode<synchronous>, transform_indices = @transform_1, window_bounds = array<i64: 32, 16>}, {pipeline_mode = #tpu.pipeline_mode<synchronous>, transform_indices = @transform_2, window_bounds = array<i64: 1, 16>}, {transform_indices = @transform_3, window_bounds = array<i64: 64, 1>}, {transform_indices = @transform_4, window_bounds = array<i64: 1, 8, 128>}]} {
    %c0_i32 = arith.constant 0 : i32
    %0 = arith.cmpi eq, %arg1, %c0_i32 : i32
    %1 = arith.extui %0 : i1 to i32
    %c0_i32_0 = arith.constant 0 : i32
    %2 = arith.cmpi ne, %1, %c0_i32_0 : i32
    scf.if %2 {
      %cst_18 = arith.constant 0.000000e+00 : f32
      %37 = vector.broadcast %cst_18 : f32 to vector<1x1xf32>
      %c0_19 = arith.constant 0 : index
      %c0_20 = arith.constant 0 : index
      %38 = vector.load %arg7[%c0_19, %c0_20] : memref<1x1xf32, #tpu.memory_space<vmem>>, vector<1x1xf32>
      tpu.vector_store %arg7[%c0_19, %c0_20], %37 {strides = array<i32>} : memref<1x1xf32, #tpu.memory_space<vmem>>, vector<1x1xf32>,
    } else {
    }
    %c0 = arith.constant 0 : index
    %c0_1 = arith.constant 0 : index
    %3 = vector.load %arg2[%c0, %c0_1] : memref<64x32xf32, #tpu.memory_space<vmem>>, vector<64x32xf32>
    %c0_2 = arith.constant 0 : index
    %c0_3 = arith.constant 0 : index
    %4 = vector.load %arg3[%c0_2, %c0_3] : memref<32x16xf32, #tpu.memory_space<vmem>>, vector<32x16xf32>
    %cst = arith.constant dense<0.000000e+00> : vector<64x16xf32>
    %5 = tpu.matmul %3, %4, %cst {dimension_numbers = #tpu.dot_dimension_numbers<[1], [0], [0], [1], [0, 0, 1, 1], [], []>} : vector<64x32xf32>, vector<32x16xf32>, vector<64x16xf32> -> vector<64x16xf32>
    %c0_4 = arith.constant 0 : index
    %c0_5 = arith.constant 0 : index
    %6 = vector.load %arg4[%c0_4, %c0_5] : memref<1x16xf32, #tpu.memory_space<vmem>>, vector<1x16xf32>
    %7 = vector.broadcast %6 : vector<1x16xf32> to vector<64x16xf32>
    %8 = arith.addf %5, %7 : vector<64x16xf32>
    %9 = tpu.iota {dimensions = array<i32: 1>} : vector<64x16xi32>
    %c0_6 = arith.constant 0 : index
    %c0_7 = arith.constant 0 : index
    %10 = vector.load %arg5[%c0_6, %c0_7] : memref<64x1xi32, #tpu.memory_space<vmem>>, vector<64x1xi32>
    %11 = vector.broadcast %10 : vector<64x1xi32> to vector<64x16xi32>
    %12 = arith.cmpi eq, %9, %11 : vector<64x16xi32>
    %cst_8 = arith.constant 0xFF800000 : f32
    %13 = vector.broadcast %cst_8 : f32 to vector<64x16xf32>
    %14 = arith.select %12, %8, %13 : vector<64x16xi1>, vector<64x16xf32>
    %cst_9 = arith.constant dense<0xFF800000> : vector<64xf32>
    %15 = vector.multi_reduction <maximumf>, %14, %cst_9 [1] : vector<64x16xf32> to vector<64xf32>
    %16 = vector.shape_cast %15 : vector<64xf32> to vector<64x1xf32>
    %17 = vector.broadcast %16 : vector<64x1xf32> to vector<64x16xf32>
    %18 = arith.cmpf ogt, %8, %17 : vector<64x16xf32>
    %19 = arith.extui %18 : vector<64x16xi1> to vector<64x16xi32>
    %cst_10 = arith.constant dense<0> : vector<64xi32>
    %20 = vector.multi_reduction <add>, %19, %cst_10 [1] : vector<64x16xi32> to vector<64xi32>
    %21 = vector.shape_cast %20 : vector<64xi32> to vector<64x1xi32>
    %c1_i32 = arith.constant 1 : i32
    %22 = vector.broadcast %c1_i32 : i32 to vector<64x1xi32>
    %23 = arith.cmpi slt, %21, %22 : vector<64x1xi32>
    %24 = arith.extui %23 : vector<64x1xi1> to vector<64x1xi32>
    %25 = arith.sitofp %24 : vector<64x1xi32> to vector<64x1xf32>
    %c0_11 = arith.constant 0 : index
    %c0_12 = arith.constant 0 : index
    %26 = vector.load %arg7[%c0_11, %c0_12] : memref<1x1xf32, #tpu.memory_space<vmem>>, vector<1x1xf32>
    %27 = vector.shape_cast %25 : vector<64x1xf32> to vector<1x64x1xf32>
    %cst_13 = arith.constant dense<0.000000e+00> : vector<1xf32>
    %28 = vector.multi_reduction <add>, %27, %cst_13 [1, 2] : vector<1x64x1xf32> to vector<1xf32>
    %29 = vector.shape_cast %28 : vector<1xf32> to vector<1x1x1xf32>
    %30 = vector.extract %29[0, 0, 0] : f32 from vector<1x1x1xf32>
    %31 = vector.broadcast %30 : f32 to vector<1x1xf32>
    %32 = arith.addf %26, %31 : vector<1x1xf32>
    %c0_14 = arith.constant 0 : index
    %c0_15 = arith.constant 0 : index
    %33 = vector.load %arg7[%c0_14, %c0_15] : memref<1x1xf32, #tpu.memory_space<vmem>>, vector<1x1xf32>
    tpu.vector_store %arg7[%c0_14, %c0_15], %32 {strides = array<i32>} : memref<1x1xf32, #tpu.memory_space<vmem>>, vector<1x1xf32>,
    %c0_i32_16 = arith.constant 0 : i32
    %34 = arith.cmpi eq, %arg1, %c0_i32_16 : i32
    %35 = arith.extui %34 : i1 to i32
    %c0_i32_17 = arith.constant 0 : i32
    %36 = arith.cmpi ne, %35, %c0_i32_17 : i32
    scf.if %36 {
      %c0_18 = arith.constant 0 : index
      %c0_19 = arith.constant 0 : index
      %37 = vector.load %arg7[%c0_18, %c0_19] : memref<1x1xf32, #tpu.memory_space<vmem>>, vector<1x1xf32>
      %38 = vector.shape_cast %37 : vector<1x1xf32> to vector<1x1x1xf32>
      %cst_20 = arith.constant dense<0.000000e+00> : vector<1xf32>
      %39 = vector.multi_reduction <add>, %38, %cst_20 [1, 2] : vector<1x1x1xf32> to vector<1xf32>
      %40 = vector.shape_cast %39 : vector<1xf32> to vector<1x1x1xf32>
      %41 = vector.extract %40[0, 0, 0] : f32 from vector<1x1x1xf32>
      %42 = vector.broadcast %41 : f32 to vector<1x8x128xf32>
      %c0_21 = arith.constant 0 : index
      %c0_22 = arith.constant 0 : index
      %c0_23 = arith.constant 0 : index
      %43 = vector.load %arg6[%c0_21, %c0_22, %c0_23] : memref<1x8x128xf32, #tpu.memory_space<vmem>>, vector<1x8x128xf32>
      tpu.vector_store %arg6[%c0_21, %c0_22, %c0_23], %42 {strides = array<i32>} : memref<1x8x128xf32, #tpu.memory_space<vmem>>, vector<1x8x128xf32>,
    } else {
    }
    return
  }
  func.func @transform_0(%arg0: i32, %arg1: i32) -> (i32, i32) {
    %c1_i32 = arith.constant 1 : i32
    %0 = arith.muli %arg0, %c1_i32 : i32
    %1 = arith.addi %0, %arg1 : i32
    %c0_i32 = arith.constant 0 : i32
    %c0_i32_0 = arith.constant 0 : i32
    return %1, %c0_i32 : i32, i32
  }
  func.func @transform_1(%arg0: i32, %arg1: i32) -> (i32, i32) {
    %c0_i32 = arith.constant 0 : i32
    %c0_i32_0 = arith.constant 0 : i32
    %c0_i32_1 = arith.constant 0 : i32
    return %c0_i32, %c0_i32_0 : i32, i32
  }
  func.func @transform_2(%arg0: i32, %arg1: i32) -> (i32, i32) {
    %c0_i32 = arith.constant 0 : i32
    %c0_i32_0 = arith.constant 0 : i32
    %c0_i32_1 = arith.constant 0 : i32
    return %c0_i32, %c0_i32_0 : i32, i32
  }
  func.func @transform_3(%arg0: i32, %arg1: i32) -> (i32, i32) {
    %c1_i32 = arith.constant 1 : i32
    %0 = arith.muli %arg0, %c1_i32 : i32
    %1 = arith.addi %0, %arg1 : i32
    %c0_i32 = arith.constant 0 : i32
    %c0_i32_0 = arith.constant 0 : i32
    return %1, %c0_i32 : i32, i32
  }
  func.func @transform_4(%arg0: i32, %arg1: i32) -> (i32, i32, i32) {
    %c0_i32 = arith.constant 0 : i32
    %c0_i32_0 = arith.constant 0 : i32
    %c0_i32_1 = arith.constant 0 : i32
    return %arg0, %c0_i32, %c0_i32_0 : i32, i32, i32
  }
}

module attributes {stable_mosaic.version = 11 : i64} {
  func.func @_accuracy_kernel(%arg0: i32, %arg1: i32, %arg2: memref<64x32xf32, #tpu.memory_space<vmem>>, %arg3: memref<32x16xf32, #tpu.memory_space<vmem>>, %arg4: memref<1x16xf32, #tpu.memory_space<vmem>>, %arg5: memref<64x1xi32, #tpu.memory_space<vmem>>, %arg6: memref<1x8x128xf32, #tpu.memory_space<vmem>>, %arg7: memref<1x1xf32, #tpu.memory_space<vmem>>) attributes {dimension_semantics = [#tpu.dimension_semantics<parallel>, #tpu.dimension_semantics<arbitrary>], iteration_bounds = array<i64: 1, 1>, scalar_prefetch = 0 : i64, scratch_operands = 1 : i64, tpu.core_type = #tpu.core_type<tc>, window_params = [{transform_indices = @transform_0, window_bounds = array<i64: 64, 32>}, {pipeline_mode = #tpu.pipeline_mode<synchronous>, transform_indices = @transform_1, window_bounds = array<i64: 32, 16>}, {pipeline_mode = #tpu.pipeline_mode<synchronous>, transform_indices = @transform_2, window_bounds = array<i64: 1, 16>}, {transform_indices = @transform_3, window_bounds = array<i64: 64, 1>}, {transform_indices = @transform_4, window_bounds = array<i64: 1, 8, 128>}]} {
    %c0_i32 = arith.constant 0 : i32
    %0 = arith.cmpi eq, %arg1, %c0_i32 : i32
    %1 = arith.extui %0 : i1 to i32
    %c0_i32_0 = arith.constant 0 : i32
    %2 = arith.cmpi ne, %1, %c0_i32_0 : i32
    scf.if %2 {
      %cst_18 = arith.constant 0.000000e+00 : f32
      %37 = vector.broadcast %cst_18 : f32 to vector<1x1xf32>
      %c0_19 = arith.constant 0 : index
      %c0_20 = arith.constant 0 : index
      %38 = vector.load %arg7[%c0_19, %c0_20] : memref<1x1xf32, #tpu.memory_space<vmem>>, vector<1x1xf32>
      tpu.vector_store %arg7[%c0_19, %c0_20], %37 {strides = array<i32>} : memref<1x1xf32, #tpu.memory_space<vmem>>, vector<1x1xf32>,
    } else {
    }
    %c0 = arith.constant 0 : index
    %c0_1 = arith.constant 0 : index
    %3 = vector.load %arg2[%c0, %c0_1] : memref<64x32xf32, #tpu.memory_space<vmem>>, vector<64x32xf32>
    %c0_2 = arith.constant 0 : index
    %c0_3 = arith.constant 0 : index
    %4 = vector.load %arg3[%c0_2, %c0_3] : memref<32x16xf32, #tpu.memory_space<vmem>>, vector<32x16xf32>
    %cst = arith.constant dense<0.000000e+00> : vector<64x16xf32>
    %5 = tpu.matmul %3, %4, %cst {dimension_numbers = #tpu.dot_dimension_numbers<[1], [0], [0], [1], [0, 0, 1, 1], [], []>} : vector<64x32xf32>, vector<32x16xf32>, vector<64x16xf32> -> vector<64x16xf32>
    %c0_4 = arith.constant 0 : index
    %c0_5 = arith.constant 0 : index
    %6 = vector.load %arg4[%c0_4, %c0_5] : memref<1x16xf32, #tpu.memory_space<vmem>>, vector<1x16xf32>
    %7 = vector.broadcast %6 : vector<1x16xf32> to vector<64x16xf32>
    %8 = arith.addf %5, %7 : vector<64x16xf32>
    %9 = tpu.iota {dimensions = array<i32: 1>} : vector<64x16xi32>
    %c0_6 = arith.constant 0 : index
    %c0_7 = arith.constant 0 : index
    %10 = vector.load %arg5[%c0_6, %c0_7] : memref<64x1xi32, #tpu.memory_space<vmem>>, vector<64x1xi32>
    %11 = vector.broadcast %10 : vector<64x1xi32> to vector<64x16xi32>
    %12 = arith.cmpi eq, %9, %11 : vector<64x16xi32>
    %cst_8 = arith.constant 0xFF800000 : f32
    %13 = vector.broadcast %cst_8 : f32 to vector<64x16xf32>
    %14 = arith.select %12, %8, %13 : vector<64x16xi1>, vector<64x16xf32>
    %cst_9 = arith.constant dense<0xFF800000> : vector<64xf32>
    %15 = vector.multi_reduction <maximumf>, %14, %cst_9 [1] : vector<64x16xf32> to vector<64xf32>
    %16 = vector.shape_cast %15 : vector<64xf32> to vector<64x1xf32>
    %17 = vector.broadcast %16 : vector<64x1xf32> to vector<64x16xf32>
    %18 = arith.cmpf ogt, %8, %17 : vector<64x16xf32>
    %19 = arith.extui %18 : vector<64x16xi1> to vector<64x16xi32>
    %cst_10 = arith.constant dense<0> : vector<64xi32>
    %20 = vector.multi_reduction <add>, %19, %cst_10 [1] : vector<64x16xi32> to vector<64xi32>
    %21 = vector.shape_cast %20 : vector<64xi32> to vector<64x1xi32>
    %c1_i32 = arith.constant 1 : i32
    %22 = vector.broadcast %c1_i32 : i32 to vector<64x1xi32>
    %23 = arith.cmpi slt, %21, %22 : vector<64x1xi32>
    %24 = arith.extui %23 : vector<64x1xi1> to vector<64x1xi32>
    %25 = arith.sitofp %24 : vector<64x1xi32> to vector<64x1xf32>
    %c0_11 = arith.constant 0 : index
    %c0_12 = arith.constant 0 : index
    %26 = vector.load %arg7[%c0_11, %c0_12] : memref<1x1xf32, #tpu.memory_space<vmem>>, vector<1x1xf32>
    %27 = vector.shape_cast %25 : vector<64x1xf32> to vector<1x64x1xf32>
    %cst_13 = arith.constant dense<0.000000e+00> : vector<1xf32>
    %28 = vector.multi_reduction <add>, %27, %cst_13 [1, 2] : vector<1x64x1xf32> to vector<1xf32>
    %29 = vector.shape_cast %28 : vector<1xf32> to vector<1x1x1xf32>
    %30 = vector.extract %29[0, 0, 0] : f32 from vector<1x1x1xf32>
    %31 = vector.broadcast %30 : f32 to vector<1x1xf32>
    %32 = arith.addf %26, %31 : vector<1x1xf32>
    %c0_14 = arith.constant 0 : index
    %c0_15 = arith.constant 0 : index
    %33 = vector.load %arg7[%c0_14, %c0_15] : memref<1x1xf32, #tpu.memory_space<vmem>>, vector<1x1xf32>
    tpu.vector_store %arg7[%c0_14, %c0_15], %32 {strides = array<i32>} : memref<1x1xf32, #tpu.memory_space<vmem>>, vector<1x1xf32>,
    %c0_i32_16 = arith.constant 0 : i32
    %34 = arith.cmpi eq, %arg1, %c0_i32_16 : i32
    %35 = arith.extui %34 : i1 to i32
    %c0_i32_17 = arith.constant 0 : i32
    %36 = arith.cmpi ne, %35, %c0_i32_17 : i32
    scf.if %36 {
      %c0_18 = arith.constant 0 : index
      %c0_19 = arith.constant 0 : index
      %37 = vector.load %arg7[%c0_18, %c0_19] : memref<1x1xf32, #tpu.memory_space<vmem>>, vector<1x1xf32>
      %38 = vector.shape_cast %37 : vector<1x1xf32> to vector<1x1x1xf32>
      %cst_20 = arith.constant dense<0.000000e+00> : vector<1xf32>
      %39 = vector.multi_reduction <add>, %38, %cst_20 [1, 2] : vector<1x1x1xf32> to vector<1xf32>
      %40 = vector.shape_cast %39 : vector<1xf32> to vector<1x1x1xf32>
      %41 = vector.extract %40[0, 0, 0] : f32 from vector<1x1x1xf32>
      %42 = vector.broadcast %41 : f32 to vector<1x8x128xf32>
      %c0_21 = arith.constant 0 : index
      %c0_22 = arith.constant 0 : index
      %c0_23 = arith.constant 0 : index
      %43 = vector.load %arg6[%c0_21, %c0_22, %c0_23] : memref<1x8x128xf32, #tpu.memory_space<vmem>>, vector<1x8x128xf32>
      tpu.vector_store %arg6[%c0_21, %c0_22, %c0_23], %42 {strides = array<i32>} : memref<1x8x128xf32, #tpu.memory_space<vmem>>, vector<1x8x128xf32>,
    } else {
    }
    return
  }
  func.func @transform_0(%arg0: i32, %arg1: i32) -> (i32, i32) {
    %c1_i32 = arith.constant 1 : i32
    %0 = arith.muli %arg0, %c1_i32 : i32
    %1 = arith.addi %0, %arg1 : i32
    %c0_i32 = arith.constant 0 : i32
    %c0_i32_0 = arith.constant 0 : i32
    return %1, %c0_i32 : i32, i32
  }
  func.func @transform_1(%arg0: i32, %arg1: i32) -> (i32, i32) {
    %c0_i32 = arith.constant 0 : i32
    %c0_i32_0 = arith.constant 0 : i32
    %c0_i32_1 = arith.constant 0 : i32
    return %c0_i32, %c0_i32_0 : i32, i32
  }
  func.func @transform_2(%arg0: i32, %arg1: i32) -> (i32, i32) {
    %c0_i32 = arith.constant 0 : i32
    %c0_i32_0 = arith.constant 0 : i32
    %c0_i32_1 = arith.constant 0 : i32
    return %c0_i32, %c0_i32_0 : i32, i32
  }
  func.func @transform_3(%arg0: i32, %arg1: i32) -> (i32, i32) {
    %c1_i32 = arith.constant 1 : i32
    %0 = arith.muli %arg0, %c1_i32 : i32
    %1 = arith.addi %0, %arg1 : i32
    %c0_i32 = arith.constant 0 : i32
    %c0_i32_0 = arith.constant 0 : i32
    return %1, %c0_i32 : i32, i32
  }
  func.func @transform_4(%arg0: i32, %arg1: i32) -> (i32, i32, i32) {
    %c0_i32 = arith.constant 0 : i32
    %c0_i32_0 = arith.constant 0 : i32
    %c0_i32_1 = arith.constant 0 : i32
    return %arg0, %c0_i32, %c0_i32_0 : i32, i32, i32
  }
}

</mosaic_0001>

<llo_original>
// kernel: tpu_custom_call.1
$region0: #{tpu_custom_call.1}
  #allocation0 [shape = 'u32[]', space=smem, size = 0x4, offset = 0x4, fixed_abs, tag = 'smem constant byte address 0x4 - core index']
  #allocation1 [shape = 'u32[144,128]{1,0:T(1,128)}', space=vmem, size = 0x12000, scoped, tag = 'internal scratch']
  #allocation2 [shape = 'f32[1,1]{1,0:T(1,128)}', space=vmem, size = 0x200, scoped, tag = 'scratch operand']
  %s0 = inlined_call_operand.vmem [shape: f32[64,32], index: 0, kind: input, shape index: {}]
  %s1 = inlined_call_operand.vmem [shape: f32[32,16], index: 1, kind: input, shape index: {}]
  %s2 = inlined_call_operand.vmem [shape: f32[1,16], index: 2, kind: input, shape index: {}]
  %s3 = inlined_call_operand.vmem [shape: s32[64,1], index: 3, kind: input, shape index: {}]
  %s4 = inlined_call_operand.hbm [shape: f32[1,8,128], index: 4, kind: output, shape index: {}]
  %s5 = sld [smem:[#allocation0]]
  $region34: #{tpu_custom_call.1} parent=0
    _
  %s7 = ssub.s32 1, %s5
  %s8 = scalar_select 0, %s7, %s5
  $region1: #{tpu_custom_call.1} parent=0
    #allocation3 [shape = 'u8[4096]{0}', space=vmem, size = 0x1000, scoped, tag = 'output window, operand 0, single buffered']
    #allocation4 [shape = 's32[1]{0}', space=sflag, size = 0x4, scoped, tag = 'scoped memory for tpu_custom_call.1']
    %9 = vsyncpa [#allocation4], 0
    // Predicated region
    $region2: #{tpu_custom_call.1} parent=1 // pred_check
      _
    $region3: #{tpu_custom_call.1} parent=1 // pred_check_branch
      %11 = sbr.rel (0) target = $region5
    $region4: #{tpu_custom_call.1} parent=1 // pred_region
      %s12 = sadd.s32 0, 0
      %s13 = smul.u32 8, %s12
      %p14 = scmp.lt.s32.totalorder %s13, 7
      %s15 = scalar_select %p14, %s13, 7
      %s16 = smul.addr %s15, 8
      %s17 = scalar_lea.vmem %s0, %s16
      %s18 = sadd.s32 0, 0
      %s19 = smul.u32 8, %s18
    $region5: #{tpu_custom_call.1} parent=1 // pred_fallthru
      _
    // Predicated region
    $region6: #{tpu_custom_call.1} parent=1 // pred_check
      _
    $region7: #{tpu_custom_call.1} parent=1 // pred_check_branch
      %21 = sbr.rel (0) target = $region9
    $region8: #{tpu_custom_call.1} parent=1 // pred_region
      _
    $region9: #{tpu_custom_call.1} parent=1 // pred_fallthru
      _
    // Predicated region
    $region10: #{tpu_custom_call.1} parent=1 // pred_check
      _
    $region11: #{tpu_custom_call.1} parent=1 // pred_check_branch
      %23 = sbr.rel (0) target = $region13
    $region12: #{tpu_custom_call.1} parent=1 // pred_region
      _
    $region13: #{tpu_custom_call.1} parent=1 // pred_fallthru
      _
    // Predicated region
    $region14: #{tpu_custom_call.1} parent=1 // pred_check
      _
    $region15: #{tpu_custom_call.1} parent=1 // pred_check_branch
      %25 = sbr.rel (0) target = $region17
    $region16: #{tpu_custom_call.1} parent=1 // pred_region
      %s26 = sadd.s32 0, 0
      %s27 = smul.u32 8, %s26
      %p28 = scmp.lt.s32.totalorder %s27, 7
      %s29 = scalar_select %p28, %s27, 7
      %s30 = smul.addr %s29, 8
      %s31 = scalar_lea.vmem %s3, %s30
      %s32 = sadd.s32 0, 0
      %s33 = smul.u32 8, %s32
    $region17: #{tpu_custom_call.1} parent=1 // pred_fallthru
      _
    %s34 = sadd.s32 0, 0
    %s35 = smul.u32 8, %s34
    %p36 = scmp.lt.s32.totalorder %s35, 7
    %s37 = scalar_select %p36, %s35, 7
    %s38 = smul.addr %s37, 8
    %s39 = scalar_lea.vmem %s0, %s38
    %s40 = sadd.s32 0, 0
    %s41 = smul.u32 8, %s40
    %p42 = scmp.lt.s32.totalorder %s41, 7
    %s43 = scalar_select %p42, %s41, 7
    %s44 = smul.addr %s43, 8
    %s45 = scalar_lea.vmem %s3, %s44
    %s46 = sadd.s32 0, 0
    %s47 = smul.u32 8, %s46
    %p48 = scmp.lt.s32.totalorder %s47, 7
    %s49 = scalar_select %p48, %s47, 7
    %s50 = smul.addr %s49, 8
    %s51 = scalar_lea.vmem %s0, %s50
    %s52 = sadd.s32 0, 0
    %s53 = smul.u32 8, %s52
    %s54 = sadd.s32 0, 0
    %s55 = smul.u32 8, %s54
    %p56 = scmp.lt.s32.totalorder %s55, 7
    %s57 = scalar_select %p56, %s55, 7
    %s58 = smul.addr %s57, 8
    %s59 = scalar_lea.vmem %s3, %s58
    %s60 = sadd.s32 0, 0
    %s61 = smul.u32 8, %s60
    %p62 = scmp.eq.s32.totalorder 0, 0
    // Predicated region
    $region18: #{tpu_custom_call.1} parent=1 // pred_check
      %p63 = pneg %p62
    $region19: #{tpu_custom_call.1} parent=1 // pred_check_branch
      %65 = sbr.rel (%p63) target = $region21
    $region20: #{tpu_custom_call.1} parent=1 // pred_region
      %vm66 = vcmask 0
      %67 = vst.msk [vmem:[#allocation2] sm:$0x1] %vm66, 0.0
    $region21: #{tpu_custom_call.1} parent=1 // pred_fallthru
      _
    %v68 = vld [vmem:[%s51] sm:$0xff]
    %v69 = vld [vmem:[%s51 + $0x8] sm:$0xff]
    %v70 = vld [vmem:[%s51 + $0x10] sm:$0xff]
    %v71 = vld [vmem:[%s51 + $0x18] sm:$0xff]
    %v72 = vld [vmem:[%s51 + $0x20] sm:$0xff]
    %v73 = vld [vmem:[%s51 + $0x28] sm:$0xff]
    %v74 = vld [vmem:[%s51 + $0x30] sm:$0xff]
    %v75 = vld [vmem:[%s51 + $0x38] sm:$0xff]
    %v76 = vld [vmem:[%s1] sm:$0xff]
    %v77 = vld [vmem:[%s1 + $0x8] sm:$0xff]
    %v78 = vld [vmem:[%s1 + $0x10] sm:$0xff]
    %v79 = vld [vmem:[%s1 + $0x18] sm:$0xff]
    %v80 = vld [vmem:[%s2] sm:$0x1]
    %v82 = vlaneseq
    %v83 = vshrl.u32 %v82, 7
    %v84 = vsub.s32 0, %v83
    %v85 = vrot.slane %v80, %v84
    %vm87 = vcmask 261120
    %v89 = vsel %vm87, %v68, 0
    %v92 = vsel %vm87, %v69, 0
    %v95 = vsel %vm87, %v70, 0
    %v98 = vsel %vm87, %v71, 0
    %v101 = vsel %vm87, %v72, 0
    %v104 = vsel %vm87, %v73, 0
    %v107 = vsel %vm87, %v74, 0
    %v110 = vsel %vm87, %v75, 0
    %112 = vmatprep.subr.mxu0 0.0
    %113 = vmatpush1.msra.mxu0 %v76
    %114 = vmatprep.subr.mxu0 0.0
    %115 = vmatpush1.msra.mxu0 %v77
    %116 = vmatprep.subr.mxu0 0.0
    %117 = vmatpush1.msra.mxu0 %v78
    %118 = vmatprep.subr.mxu0 0.0
    %119 = vmatpush1.msra.mxu0 %v79
    %120 = vmatprep.subr.mxu0 0.0
    %121 = vmatpush1.msra.mxu0 0.0
    %122 = vmatprep.subr.mxu0 0.0
    %123 = vmatpush1.msra.mxu0 0.0
    %124 = vmatprep.subr.mxu0 0.0
    %125 = vmatpush1.msra.mxu0 0.0
    %126 = vmatprep.subr.mxu0 0.0
    %127 = vmatpush1.msra.mxu0 0.0
    %128 = vmatprep.subr.mxu0 0.0
    %129 = vmatpush1.msra.mxu0 0.0
    %130 = vmatprep.subr.mxu0 0.0
    %131 = vmatpush1.msra.mxu0 0.0
    %132 = vmatprep.subr.mxu0 0.0
    %133 = vmatpush1.msra.mxu0 0.0
    %134 = vmatprep.subr.mxu0 0.0
    %135 = vmatpush1.msra.mxu0 0.0
    %136 = vmatprep.subr.mxu0 0.0
    %137 = vmatpush1.msra.mxu0 0.0
    %138 = vmatprep.subr.mxu0 0.0
    %139 = vmatpush1.msra.mxu0 0.0
    %140 = vmatprep.subr.mxu0 0.0
    %141 = vmatpush1.msra.mxu0 0.0
    %142 = vmatprep.subr.mxu0 0.0
    %143 = vmatpush1.msra.mxu0 0.0
    %144 = vmatprep.subr.mxu0 0.0
    %145 = vmatpush1.msra.mxu0 0.0
    %146 = vmatprep.subr.mxu0 0.0
    %147 = vmatpush1.msra.mxu0 0.0
    %148 = vmatprep.subr.mxu0 0.0
    %149 = vmatpush1.msra.mxu0 0.0
    %150 = vmatprep.subr.mxu0 0.0
    %151 = vmatpush1.msra.mxu0 0.0
    %152 = vmatprep.subr.mxu0 0.0
    %153 = vmatpush1.msra.mxu0 0.0
    %154 = vmatprep.subr.mxu0 0.0
    %155 = vmatpush1.msra.mxu0 0.0
    %156 = vmatprep.subr.mxu0 0.0
    %157 = vmatpush1.msra.mxu0 0.0
    %158 = vmatprep.subr.mxu0 0.0
    %159 = vmatpush1.msra.mxu0 0.0
    %160 = vmatprep.subr.mxu0 0.0
    %161 = vmatpush1.msra.mxu0 0.0
    %162 = vmatprep.subr.mxu0 0.0
    %163 = vmatpush1.msra.mxu0 0.0
    %164 = vmatprep.subr.mxu0 0.0
    %165 = vmatpush1.msra.mxu0 0.0
    %166 = vmatprep.subr.mxu0 0.0
    %167 = vmatpush1.msra.mxu0 0.0
    %168 = vmatprep.subr.mxu0 0.0
    %169 = vmatpush1.msra.mxu0 0.0
    %170 = vmatprep.subr.mxu0 0.0
    %171 = vmatpush1.msra.mxu0 0.0
    %172 = vmatprep.subr.mxu0 0.0
    %173 = vmatpush1.msra.mxu0 0.0
    %174 = vmatprep.subr.mxu0 0.0
    %175 = vmatpush1.msra.mxu0 0.0
    %176 = vmatprep.mubr.f32.mxu0 0.0
    %177 = vmatmul.mubr.f32.gmra.mrb[0].mxu0 %v89
    %v178 = vpop.f32.mrb[0].mxu0
    %v179 = vadd.f32 %v85, %v178
    %v180 = vpop.f32.mrb[0].mxu0
    %181 = vmatprep.mubr.f32.mxu0 0.0
    %182 = vmatmul.mubr.f32.gmra.mrb[0].mxu0 %v92
    %v183 = vpop.f32.mrb[0].mxu0
    %v184 = vadd.f32 %v85, %v183
    %v185 = vpop.f32.mrb[0].mxu0
    %186 = vmatprep.mubr.f32.mxu0 0.0
    %187 = vmatmul.mubr.f32.gmra.mrb[0].mxu0 %v95
    %v188 = vpop.f32.mrb[0].mxu0
    %v189 = vadd.f32 %v85, %v188
    %v190 = vpop.f32.mrb[0].mxu0
    %191 = vmatprep.mubr.f32.mxu0 0.0
    %192 = vmatmul.mubr.f32.gmra.mrb[0].mxu0 %v98
    %v193 = vpop.f32.mrb[0].mxu0
    %v194 = vadd.f32 %v85, %v193
    %v195 = vpop.f32.mrb[0].mxu0
    %196 = vmatprep.mubr.f32.mxu0 0.0
    %197 = vmatmul.mubr.f32.gmra.mrb[0].mxu0 %v101
    %v198 = vpop.f32.mrb[0].mxu0
    %v199 = vadd.f32 %v85, %v198
    %v200 = vpop.f32.mrb[0].mxu0
    %201 = vmatprep.mubr.f32.mxu0 0.0
    %202 = vmatmul.mubr.f32.gmra.mrb[0].mxu0 %v104
    %v203 = vpop.f32.mrb[0].mxu0
    %v204 = vadd.f32 %v85, %v203
    %v205 = vpop.f32.mrb[0].mxu0
    %206 = vmatprep.mubr.f32.mxu0 0.0
    %207 = vmatmul.mubr.f32.gmra.mrb[0].mxu0 %v107
    %v208 = vpop.f32.mrb[0].mxu0
    %v209 = vadd.f32 %v85, %v208
    %v210 = vpop.f32.mrb[0].mxu0
    %211 = vmatprep.mubr.f32.mxu0 0.0
    %212 = vmatmul.mubr.f32.gmra.mrb[0].mxu0 %v110
    %v213 = vpop.f32.mrb[0].mxu0
    %v214 = vadd.f32 %v85, %v213
    %v215 = vpop.f32.mrb[0].mxu0
    %216 = vdwg.mxu0
    %v217 = vlaneseq
    %v218 = vand.u32 %v217, 127
    %v219 = vld [vmem:[%s59] sm:$0xff]
    %v220 = vld [vmem:[%s59 + $0x8] sm:$0xff]
    %v221 = vld [vmem:[%s59 + $0x10] sm:$0xff]
    %v222 = vld [vmem:[%s59 + $0x18] sm:$0xff]
    %v223 = vld [vmem:[%s59 + $0x20] sm:$0xff]
    %v224 = vld [vmem:[%s59 + $0x28] sm:$0xff]
    %v225 = vld [vmem:[%s59 + $0x30] sm:$0xff]
    %v226 = vld [vmem:[%s59 + $0x38] sm:$0xff]
    %227 = vset.pattern.permute.xlu0 0
    %228 = vperm.xlu0 %227, %v219
    %v229 = vpop.permute.xlu0 %228
    %230 = vset.pattern.permute.xlu0 0
    %231 = vperm.xlu0 %230, %v220
    %v232 = vpop.permute.xlu0 %231
    %233 = vset.pattern.permute.xlu0 0
    %234 = vperm.xlu0 %233, %v221
    %v235 = vpop.permute.xlu0 %234
    %236 = vset.pattern.permute.xlu0 0
    %237 = vperm.xlu0 %236, %v222
    %v238 = vpop.permute.xlu0 %237
    %239 = vset.pattern.permute.xlu0 0
    %240 = vperm.xlu0 %239, %v223
    %v241 = vpop.permute.xlu0 %240
    %242 = vset.pattern.permute.xlu0 0
    %243 = vperm.xlu0 %242, %v224
    %v244 = vpop.permute.xlu0 %243
    %245 = vset.pattern.permute.xlu0 0
    %246 = vperm.xlu0 %245, %v225
    %v247 = vpop.permute.xlu0 %246
    %248 = vset.pattern.permute.xlu0 0
    %249 = vperm.xlu0 %248, %v226
    %v250 = vpop.permute.xlu0 %249
    %vm251 = vcmp.eq.s32.totalorder %v218, %v229
    %vm252 = vcmp.eq.s32.totalorder %v218, %v232
    %vm253 = vcmp.eq.s32.totalorder %v218, %v235
    %vm254 = vcmp.eq.s32.totalorder %v218, %v238
    %vm255 = vcmp.eq.s32.totalorder %v218, %v241
    %vm256 = vcmp.eq.s32.totalorder %v218, %v244
    %vm257 = vcmp.eq.s32.totalorder %v218, %v247
    %vm258 = vcmp.eq.s32.totalorder %v218, %v250
    %v259 = vsel %vm251, %v179, -inf
    %v260 = vsel %vm252, %v184, -inf
    %v261 = vsel %vm253, %v189, -inf
    %v262 = vsel %vm254, %v194, -inf
    %v263 = vsel %vm255, %v199, -inf
    %v264 = vsel %vm256, %v204, -inf
    %v265 = vsel %vm257, %v209, -inf
    %v266 = vsel %vm258, %v214, -inf
    %vm267 = vcmask 130048
    %v268 = vsel %vm267, %v259, -inf
    %269 = vmax.xlane.f32.xlu0 %v268
    %v270 = vpop.xlane.xlu0 %269
    %v271 = vsel %vm267, %v260, -inf
    %272 = vmax.xlane.f32.xlu0 %v271
    %v273 = vpop.xlane.xlu0 %272
    %v274 = vsel %vm267, %v261, -inf
    %275 = vmax.xlane.f32.xlu0 %v274
    %v276 = vpop.xlane.xlu0 %275
    %v277 = vsel %vm267, %v262, -inf
    %278 = vmax.xlane.f32.xlu0 %v277
    %v279 = vpop.xlane.xlu0 %278
    %v280 = vsel %vm267, %v263, -inf
    %281 = vmax.xlane.f32.xlu0 %v280
    %v282 = vpop.xlane.xlu0 %281
    %v283 = vsel %vm267, %v264, -inf
    %284 = vmax.xlane.f32.xlu0 %v283
    %v285 = vpop.xlane.xlu0 %284
    %v286 = vsel %vm267, %v265, -inf
    %287 = vmax.xlane.f32.xlu0 %v286
    %v288 = vpop.xlane.xlu0 %287
    %v289 = vsel %vm267, %v266, -inf
    %290 = vmax.xlane.f32.xlu0 %v289
    %v291 = vpop.xlane.xlu0 %290
    %vm292 = vcmp.gt.f32.partialorder %v179, %v270
    %vm293 = vcmp.gt.f32.partialorder %v184, %v273
    %vm294 = vcmp.gt.f32.partialorder %v189, %v276
    %vm295 = vcmp.gt.f32.partialorder %v194, %v279
    %vm296 = vcmp.gt.f32.partialorder %v199, %v282
    %vm297 = vcmp.gt.f32.partialorder %v204, %v285
    %vm298 = vcmp.gt.f32.partialorder %v209, %v288
    %vm299 = vcmp.gt.f32.partialorder %v214, %v291
    %v300 = vsel %vm292, 1, 0
    %v301 = vsel %vm293, 1, 0
    %v302 = vsel %vm294, 1, 0
    %v303 = vsel %vm295, 1, 0
    %v304 = vsel %vm296, 1, 0
    %v305 = vsel %vm297, 1, 0
    %v306 = vsel %vm298, 1, 0
    %v307 = vsel %vm299, 1, 0
    %v308 = vsel %vm267, %v300, 0
    %v309 = vand.u32 %v308, 65535
    %v310 = vshrl.u32 %v308, 16
    %v311 = vcvt.s32.f32 %v309
    %v312 = vcvt.s32.f32 %v310
    %313 = vadd.xlane.f32.xlu0 %v311
    %v314 = vpop.xlane.xlu0 %313
    %315 = vadd.xlane.f32.xlu0 %v312
    %v316 = vpop.xlane.xlu0 %315
    %v317 = vcvt.f32.s32 %v314
    %v318 = vcvt.f32.s32 %v316
    %v319 = vshll.u32 %v318, 16
    %v320 = vadd.s32 %v319, %v317
    %v321 = vsel %vm267, %v301, 0
    %v322 = vand.u32 %v321, 65535
    %v323 = vshrl.u32 %v321, 16
    %v324 = vcvt.s32.f32 %v322
    %v325 = vcvt.s32.f32 %v323
    %326 = vadd.xlane.f32.xlu0 %v324
    %v327 = vpop.xlane.xlu0 %326
    %328 = vadd.xlane.f32.xlu0 %v325
    %v329 = vpop.xlane.xlu0 %328
    %v330 = vcvt.f32.s32 %v327
    %v331 = vcvt.f32.s32 %v329
    %v332 = vshll.u32 %v331, 16
    %v333 = vadd.s32 %v332, %v330
    %v334 = vsel %vm267, %v302, 0
    %v335 = vand.u32 %v334, 65535
    %v336 = vshrl.u32 %v334, 16
    %v337 = vcvt.s32.f32 %v335
    %v338 = vcvt.s32.f32 %v336
    %339 = vadd.xlane.f32.xlu0 %v337
    %v340 = vpop.xlane.xlu0 %339
    %341 = vadd.xlane.f32.xlu0 %v338
    %v342 = vpop.xlane.xlu0 %341
    %v343 = vcvt.f32.s32 %v340
    %v344 = vcvt.f32.s32 %v342
    %v345 = vshll.u32 %v344, 16
    %v346 = vadd.s32 %v345, %v343
    %v347 = vsel %vm267, %v303, 0
    %v348 = vand.u32 %v347, 65535
    %v349 = vshrl.u32 %v347, 16
    %v350 = vcvt.s32.f32 %v348
    %v351 = vcvt.s32.f32 %v349
    %352 = vadd.xlane.f32.xlu0 %v350
    %v353 = vpop.xlane.xlu0 %352
    %354 = vadd.xlane.f32.xlu0 %v351
    %v355 = vpop.xlane.xlu0 %354
    %v356 = vcvt.f32.s32 %v353
    %v357 = vcvt.f32.s32 %v355
    %v358 = vshll.u32 %v357, 16
    %v359 = vadd.s32 %v358, %v356
    %v360 = vsel %vm267, %v304, 0
    %v361 = vand.u32 %v360, 65535
    %v362 = vshrl.u32 %v360, 16
    %v363 = vcvt.s32.f32 %v361
    %v364 = vcvt.s32.f32 %v362
    %365 = vadd.xlane.f32.xlu0 %v363
    %v366 = vpop.xlane.xlu0 %365
    %367 = vadd.xlane.f32.xlu0 %v364
    %v368 = vpop.xlane.xlu0 %367
    %v369 = vcvt.f32.s32 %v366
    %v370 = vcvt.f32.s32 %v368
    %v371 = vshll.u32 %v370, 16
    %v372 = vadd.s32 %v371, %v369
    %v373 = vsel %vm267, %v305, 0
    %v374 = vand.u32 %v373, 65535
    %v375 = vshrl.u32 %v373, 16
    %v376 = vcvt.s32.f32 %v374
    %v377 = vcvt.s32.f32 %v375
    %378 = vadd.xlane.f32.xlu0 %v376
    %v379 = vpop.xlane.xlu0 %378
    %380 = vadd.xlane.f32.xlu0 %v377
    %v381 = vpop.xlane.xlu0 %380
    %v382 = vcvt.f32.s32 %v379
    %v383 = vcvt.f32.s32 %v381
    %v384 = vshll.u32 %v383, 16
    %v385 = vadd.s32 %v384, %v382
    %v386 = vsel %vm267, %v306, 0
    %v387 = vand.u32 %v386, 65535
    %v388 = vshrl.u32 %v386, 16
    %v389 = vcvt.s32.f32 %v387
    %v390 = vcvt.s32.f32 %v388
    %391 = vadd.xlane.f32.xlu0 %v389
    %v392 = vpop.xlane.xlu0 %391
    %393 = vadd.xlane.f32.xlu0 %v390
    %v394 = vpop.xlane.xlu0 %393
    %v395 = vcvt.f32.s32 %v392
    %v396 = vcvt.f32.s32 %v394
    %v397 = vshll.u32 %v396, 16
    %v398 = vadd.s32 %v397, %v395
    %v399 = vsel %vm267, %v307, 0
    %v400 = vand.u32 %v399, 65535
    %v401 = vshrl.u32 %v399, 16
    %v402 = vcvt.s32.f32 %v400
    %v403 = vcvt.s32.f32 %v401
    %404 = vadd.xlane.f32.xlu0 %v402
    %v405 = vpop.xlane.xlu0 %404
    %406 = vadd.xlane.f32.xlu0 %v403
    %v407 = vpop.xlane.xlu0 %406
    %v408 = vcvt.f32.s32 %v405
    %v409 = vcvt.f32.s32 %v407
    %v410 = vshll.u32 %v409, 16
    %v411 = vadd.s32 %v410, %v408
    %vm412 = vcmp.lt.s32.totalorder %v320, 1
    %vm413 = vcmp.lt.s32.totalorder %v333, 1
    %vm414 = vcmp.lt.s32.totalorder %v346, 1
    %vm415 = vcmp.lt.s32.totalorder %v359, 1
    %vm416 = vcmp.lt.s32.totalorder %v372, 1
    %vm417 = vcmp.lt.s32.totalorder %v385, 1
    %vm418 = vcmp.lt.s32.totalorder %v398, 1
    %vm419 = vcmp.lt.s32.totalorder %v411, 1
    %v420 = vsel %vm412, 1, 0
    %v421 = vsel %vm413, 1, 0
    %v422 = vsel %vm414, 1, 0
    %v423 = vsel %vm415, 1, 0
    %v424 = vsel %vm416, 1, 0
    %v425 = vsel %vm417, 1, 0
    %v426 = vsel %vm418, 1, 0
    %v427 = vsel %vm419, 1, 0
    %v428 = vcvt.s32.f32 %v420
    %v429 = vcvt.s32.f32 %v421
    %v430 = vcvt.s32.f32 %v422
    %v431 = vcvt.s32.f32 %v423
    %v432 = vcvt.s32.f32 %v424
    %v433 = vcvt.s32.f32 %v425
    %v434 = vcvt.s32.f32 %v426
    %v435 = vcvt.s32.f32 %v427
    %v436 = vld [vmem:[#allocation2] sm:$0x1]
    %vm437 = vcmask 7168
    %v438 = vsel %vm437, %v428, 0.0
    %v439 = vsel %vm437, %v429, 0.0
    %v440 = vadd.f32 %v438, %v439
    %v441 = vsel %vm437, %v430, 0.0
    %v442 = vadd.f32 %v440, %v441
    %v443 = vsel %vm437, %v431, 0.0
    %v444 = vadd.f32 %v442, %v443
    %v445 = vsel %vm437, %v432, 0.0
    %v446 = vadd.f32 %v444, %v445
    %v447 = vsel %vm437, %v433, 0.0
    %v448 = vadd.f32 %v446, %v447
    %v449 = vsel %vm437, %v434, 0.0
    %v450 = vadd.f32 %v448, %v449
    %v451 = vsel %vm437, %v435, 0.0
    %v452 = vadd.f32 %v450, %v451
    %453 = vadd.xlane.f32.xlu0 %v452
    %v454 = vpop.xlane.xlu0 %453
    %v455 = vrot.slane %v454, 4
    %v456 = vadd.f32 %v454, %v455
    %v457 = vrot.slane %v456, 2
    %v458 = vadd.f32 %v456, %v457
    %v459 = vrot.slane %v458, 1
    %v460 = vadd.f32 %v458, %v459
    %s461 = vtos %v460
    %v462 = vstv %s461
    %v463 = vadd.f32 %v436, %v462
    %vm464 = vcmask 0
    %465 = vst.msk [vmem:[#allocation2] sm:$0x1] %vm464, %v463
    // Predicated region
    $region22: #{tpu_custom_call.1} parent=1 // pred_check
      %p466 = pneg %p62
    $region23: #{tpu_custom_call.1} parent=1 // pred_check_branch
      %468 = sbr.rel (%p466) target = $region25
    $region24: #{tpu_custom_call.1} parent=1 // pred_region
      %v469 = vld [vmem:[#allocation2] sm:$0x1]
      %v470 = vadd.f32 %v469, 0.0
      %s471 = vtos %v470
      %v472 = vstv %s471
      %473 = vst [vmem:[#allocation3] sm:$0xff] %v472
    $region25: #{tpu_custom_call.1} parent=1 // pred_fallthru
      _
    // Predicated region
    $region26: #{tpu_custom_call.1} parent=1 // pred_check
      _
    $region27: #{tpu_custom_call.1} parent=1 // pred_check_branch
      %475 = sbr.rel (0) target = $region29
    $region28: #{tpu_custom_call.1} parent=1 // pred_region
      %s477 = ssub.s32 128, 128
      %478 = vsyncadd [#allocation4], %s477
      %s480 = sshll.u32 [#allocation3], 4
      %s481 = int_to_ptr.vmem [resolvable:$true] %s480
      %483 = dma.vmem_to_hbm [thread:$0]  %s481, 128, %s4, [#allocation4]
    $region29: #{tpu_custom_call.1} parent=1 // pred_fallthru
      _
    // Predicated region
    $region30: #{tpu_custom_call.1} parent=1 // pred_check
      _
    $region31: #{tpu_custom_call.1} parent=1 // pred_check_branch
      %485 = sbr.rel (0) target = $region33
    $region32: #{tpu_custom_call.1} parent=1 // pred_region
      %486 = dma.done [#allocation4], 128
    $region33: #{tpu_custom_call.1} parent=1 // pred_fallthru
      _
    %487 = vsyncpa [#allocation4], 1

// kernel: tpu_custom_call.1
$region0: #{tpu_custom_call.1}
  #allocation0 [shape = 'u32[]', space=smem, size = 0x4, offset = 0x4, fixed_abs, tag = 'smem constant byte address 0x4 - core index']
  #allocation1 [shape = 'u32[144,128]{1,0:T(1,128)}', space=vmem, size = 0x12000, scoped, tag = 'internal scratch']
  #allocation2 [shape = 'f32[1,1]{1,0:T(1,128)}', space=vmem, size = 0x200, scoped, tag = 'scratch operand']
  %s0 = inlined_call_operand.vmem [shape: f32[64,32], index: 0, kind: input, shape index: {}]
  %s1 = inlined_call_operand.vmem [shape: f32[32,16], index: 1, kind: input, shape index: {}]
  %s2 = inlined_call_operand.vmem [shape: f32[1,16], index: 2, kind: input, shape index: {}]
  %s3 = inlined_call_operand.vmem [shape: s32[64,1], index: 3, kind: input, shape index: {}]
  %s4 = inlined_call_operand.hbm [shape: f32[1,8,128], index: 4, kind: output, shape index: {}]
  %s5 = sld [smem:[#allocation0]]
  $region34: #{tpu_custom_call.1} parent=0
    _
  %s7 = ssub.s32 1, %s5
  %s8 = scalar_select 0, %s7, %s5
  $region1: #{tpu_custom_call.1} parent=0
    #allocation3 [shape = 'u8[4096]{0}', space=vmem, size = 0x1000, scoped, tag = 'output window, operand 0, single buffered']
    #allocation4 [shape = 's32[1]{0}', space=sflag, size = 0x4, scoped, tag = 'scoped memory for tpu_custom_call.1']
    %9 = vsyncpa [#allocation4], 0
    // Predicated region
    $region2: #{tpu_custom_call.1} parent=1 // pred_check
      _
    $region3: #{tpu_custom_call.1} parent=1 // pred_check_branch
      %11 = sbr.rel (0) target = $region5
    $region4: #{tpu_custom_call.1} parent=1 // pred_region
      %s12 = sadd.s32 0, 0
      %s13 = smul.u32 8, %s12
      %p14 = scmp.lt.s32.totalorder %s13, 7
      %s15 = scalar_select %p14, %s13, 7
      %s16 = smul.addr %s15, 8
      %s17 = scalar_lea.vmem %s0, %s16
      %s18 = sadd.s32 0, 0
      %s19 = smul.u32 8, %s18
    $region5: #{tpu_custom_call.1} parent=1 // pred_fallthru
      _
    // Predicated region
    $region6: #{tpu_custom_call.1} parent=1 // pred_check
      _
    $region7: #{tpu_custom_call.1} parent=1 // pred_check_branch
      %21 = sbr.rel (0) target = $region9
    $region8: #{tpu_custom_call.1} parent=1 // pred_region
      _
    $region9: #{tpu_custom_call.1} parent=1 // pred_fallthru
      _
    // Predicated region
    $region10: #{tpu_custom_call.1} parent=1 // pred_check
      _
    $region11: #{tpu_custom_call.1} parent=1 // pred_check_branch
      %23 = sbr.rel (0) target = $region13
    $region12: #{tpu_custom_call.1} parent=1 // pred_region
      _
    $region13: #{tpu_custom_call.1} parent=1 // pred_fallthru
      _
    // Predicated region
    $region14: #{tpu_custom_call.1} parent=1 // pred_check
      _
    $region15: #{tpu_custom_call.1} parent=1 // pred_check_branch
      %25 = sbr.rel (0) target = $region17
    $region16: #{tpu_custom_call.1} parent=1 // pred_region
      %s26 = sadd.s32 0, 0
      %s27 = smul.u32 8, %s26
      %p28 = scmp.lt.s32.totalorder %s27, 7
      %s29 = scalar_select %p28, %s27, 7
      %s30 = smul.addr %s29, 8
      %s31 = scalar_lea.vmem %s3, %s30
      %s32 = sadd.s32 0, 0
      %s33 = smul.u32 8, %s32
    $region17: #{tpu_custom_call.1} parent=1 // pred_fallthru
      _
    %s34 = sadd.s32 0, 0
    %s35 = smul.u32 8, %s34
    %p36 = scmp.lt.s32.totalorder %s35, 7
    %s37 = scalar_select %p36, %s35, 7
    %s38 = smul.addr %s37, 8
    %s39 = scalar_lea.vmem %s0, %s38
    %s40 = sadd.s32 0, 0
    %s41 = smul.u32 8, %s40
    %p42 = scmp.lt.s32.totalorder %s41, 7
    %s43 = scalar_select %p42, %s41, 7
    %s44 = smul.addr %s43, 8
    %s45 = scalar_lea.vmem %s3, %s44
    %s46 = sadd.s32 0, 0
    %s47 = smul.u32 8, %s46
    %p48 = scmp.lt.s32.totalorder %s47, 7
    %s49 = scalar_select %p48, %s47, 7
    %s50 = smul.addr %s49, 8
    %s51 = scalar_lea.vmem %s0, %s50
    %s52 = sadd.s32 0, 0
    %s53 = smul.u32 8, %s52
    %s54 = sadd.s32 0, 0
    %s55 = smul.u32 8, %s54
    %p56 = scmp.lt.s32.totalorder %s55, 7
    %s57 = scalar_select %p56, %s55, 7
    %s58 = smul.addr %s57, 8
    %s59 = scalar_lea.vmem %s3, %s58
    %s60 = sadd.s32 0, 0
    %s61 = smul.u32 8, %s60
    %p62 = scmp.eq.s32.totalorder 0, 0
    // Predicated region
    $region18: #{tpu_custom_call.1} parent=1 // pred_check
      %p63 = pneg %p62
    $region19: #{tpu_custom_call.1} parent=1 // pred_check_branch
      %65 = sbr.rel (%p63) target = $region21
    $region20: #{tpu_custom_call.1} parent=1 // pred_region
      %vm66 = vcmask 0
      %67 = vst.msk [vmem:[#allocation2] sm:$0x1] %vm66, 0.0
    $region21: #{tpu_custom_call.1} parent=1 // pred_fallthru
      _
    %v68 = vld [vmem:[%s51] sm:$0xff]
    %v69 = vld [vmem:[%s51 + $0x8] sm:$0xff]
    %v70 = vld [vmem:[%s51 + $0x10] sm:$0xff]
    %v71 = vld [vmem:[%s51 + $0x18] sm:$0xff]
    %v72 = vld [vmem:[%s51 + $0x20] sm:$0xff]
    %v73 = vld [vmem:[%s51 + $0x28] sm:$0xff]
    %v74 = vld [vmem:[%s51 + $0x30] sm:$0xff]
    %v75 = vld [vmem:[%s51 + $0x38] sm:$0xff]
    %v76 = vld [vmem:[%s1] sm:$0xff]
    %v77 = vld [vmem:[%s1 + $0x8] sm:$0xff]
    %v78 = vld [vmem:[%s1 + $0x10] sm:$0xff]
    %v79 = vld [vmem:[%s1 + $0x18] sm:$0xff]
    %v80 = vld [vmem:[%s2] sm:$0x1]
    %v82 = vlaneseq
    %v83 = vshrl.u32 %v82, 7
    %v84 = vsub.s32 0, %v83
    %v85 = vrot.slane %v80, %v84
    %vm87 = vcmask 261120
    %v89 = vsel %vm87, %v68, 0
    %v92 = vsel %vm87, %v69, 0
    %v95 = vsel %vm87, %v70, 0
    %v98 = vsel %vm87, %v71, 0
    %v101 = vsel %vm87, %v72, 0
    %v104 = vsel %vm87, %v73, 0
    %v107 = vsel %vm87, %v74, 0
    %v110 = vsel %vm87, %v75, 0
    %112 = vmatprep.subr.mxu0 0.0
    %113 = vmatpush1.msra.mxu0 %v76
    %114 = vmatprep.subr.mxu0 0.0
    %115 = vmatpush1.msra.mxu0 %v77
    %116 = vmatprep.subr.mxu0 0.0
    %117 = vmatpush1.msra.mxu0 %v78
    %118 = vmatprep.subr.mxu0 0.0
    %119 = vmatpush1.msra.mxu0 %v79
    %120 = vmatprep.subr.mxu0 0.0
    %121 = vmatpush1.msra.mxu0 0.0
    %122 = vmatprep.subr.mxu0 0.0
    %123 = vmatpush1.msra.mxu0 0.0
    %124 = vmatprep.subr.mxu0 0.0
    %125 = vmatpush1.msra.mxu0 0.0
    %126 = vmatprep.subr.mxu0 0.0
    %127 = vmatpush1.msra.mxu0 0.0
    %128 = vmatprep.subr.mxu0 0.0
    %129 = vmatpush1.msra.mxu0 0.0
    %130 = vmatprep.subr.mxu0 0.0
    %131 = vmatpush1.msra.mxu0 0.0
    %132 = vmatprep.subr.mxu0 0.0
    %133 = vmatpush1.msra.mxu0 0.0
    %134 = vmatprep.subr.mxu0 0.0
    %135 = vmatpush1.msra.mxu0 0.0
    %136 = vmatprep.subr.mxu0 0.0
    %137 = vmatpush1.msra.mxu0 0.0
    %138 = vmatprep.subr.mxu0 0.0
    %139 = vmatpush1.msra.mxu0 0.0
    %140 = vmatprep.subr.mxu0 0.0
    %141 = vmatpush1.msra.mxu0 0.0
    %142 = vmatprep.subr.mxu0 0.0
    %143 = vmatpush1.msra.mxu0 0.0
    %144 = vmatprep.subr.mxu0 0.0
    %145 = vmatpush1.msra.mxu0 0.0
    %146 = vmatprep.subr.mxu0 0.0
    %147 = vmatpush1.msra.mxu0 0.0
    %148 = vmatprep.subr.mxu0 0.0
    %149 = vmatpush1.msra.mxu0 0.0
    %150 = vmatprep.subr.mxu0 0.0
    %151 = vmatpush1.msra.mxu0 0.0
    %152 = vmatprep.subr.mxu0 0.0
    %153 = vmatpush1.msra.mxu0 0.0
    %154 = vmatprep.subr.mxu0 0.0
    %155 = vmatpush1.msra.mxu0 0.0
    %156 = vmatprep.subr.mxu0 0.0
    %157 = vmatpush1.msra.mxu0 0.0
    %158 = vmatprep.subr.mxu0 0.0
    %159 = vmatpush1.msra.mxu0 0.0
    %160 = vmatprep.subr.mxu0 0.0
    %161 = vmatpush1.msra.mxu0 0.0
    %162 = vmatprep.subr.mxu0 0.0
    %163 = vmatpush1.msra.mxu0 0.0
    %164 = vmatprep.subr.mxu0 0.0
    %165 = vmatpush1.msra.mxu0 0.0
    %166 = vmatprep.subr.mxu0 0.0
    %167 = vmatpush1.msra.mxu0 0.0
    %168 = vmatprep.subr.mxu0 0.0
    %169 = vmatpush1.msra.mxu0 0.0
    %170 = vmatprep.subr.mxu0 0.0
    %171 = vmatpush1.msra.mxu0 0.0
    %172 = vmatprep.subr.mxu0 0.0
    %173 = vmatpush1.msra.mxu0 0.0
    %174 = vmatprep.subr.mxu0 0.0
    %175 = vmatpush1.msra.mxu0 0.0
    %176 = vmatprep.mubr.f32.mxu0 0.0
    %177 = vmatmul.mubr.f32.gmra.mrb[0].mxu0 %v89
    %v178 = vpop.f32.mrb[0].mxu0
    %v179 = vadd.f32 %v85, %v178
    %v180 = vpop.f32.mrb[0].mxu0
    %181 = vmatprep.mubr.f32.mxu0 0.0
    %182 = vmatmul.mubr.f32.gmra.mrb[0].mxu0 %v92
    %v183 = vpop.f32.mrb[0].mxu0
    %v184 = vadd.f32 %v85, %v183
    %v185 = vpop.f32.mrb[0].mxu0
    %186 = vmatprep.mubr.f32.mxu0 0.0
    %187 = vmatmul.mubr.f32.gmra.mrb[0].mxu0 %v95
    %v188 = vpop.f32.mrb[0].mxu0
    %v189 = vadd.f32 %v85, %v188
    %v190 = vpop.f32.mrb[0].mxu0
    %191 = vmatprep.mubr.f32.mxu0 0.0
    %192 = vmatmul.mubr.f32.gmra.mrb[0].mxu0 %v98
    %v193 = vpop.f32.mrb[0].mxu0
    %v194 = vadd.f32 %v85, %v193
    %v195 = vpop.f32.mrb[0].mxu0
    %196 = vmatprep.mubr.f32.mxu0 0.0
    %197 = vmatmul.mubr.f32.gmra.mrb[0].mxu0 %v101
    %v198 = vpop.f32.mrb[0].mxu0
    %v199 = vadd.f32 %v85, %v198
    %v200 = vpop.f32.mrb[0].mxu0
    %201 = vmatprep.mubr.f32.mxu0 0.0
    %202 = vmatmul.mubr.f32.gmra.mrb[0].mxu0 %v104
    %v203 = vpop.f32.mrb[0].mxu0
    %v204 = vadd.f32 %v85, %v203
    %v205 = vpop.f32.mrb[0].mxu0
    %206 = vmatprep.mubr.f32.mxu0 0.0
    %207 = vmatmul.mubr.f32.gmra.mrb[0].mxu0 %v107
    %v208 = vpop.f32.mrb[0].mxu0
    %v209 = vadd.f32 %v85, %v208
    %v210 = vpop.f32.mrb[0].mxu0
    %211 = vmatprep.mubr.f32.mxu0 0.0
    %212 = vmatmul.mubr.f32.gmra.mrb[0].mxu0 %v110
    %v213 = vpop.f32.mrb[0].mxu0
    %v214 = vadd.f32 %v85, %v213
    %v215 = vpop.f32.mrb[0].mxu0
    %216 = vdwg.mxu0
    %v217 = vlaneseq
    %v218 = vand.u32 %v217, 127
    %v219 = vld [vmem:[%s59] sm:$0xff]
    %v220 = vld [vmem:[%s59 + $0x8] sm:$0xff]
    %v221 = vld [vmem:[%s59 + $0x10] sm:$0xff]
    %v222 = vld [vmem:[%s59 + $0x18] sm:$0xff]
    %v223 = vld [vmem:[%s59 + $0x20] sm:$0xff]
    %v224 = vld [vmem:[%s59 + $0x28] sm:$0xff]
    %v225 = vld [vmem:[%s59 + $0x30] sm:$0xff]
    %v226 = vld [vmem:[%s59 + $0x38] sm:$0xff]
    %227 = vset.pattern.permute.xlu0 0
    %228 = vperm.xlu0 %227, %v219
    %v229 = vpop.permute.xlu0 %228
    %230 = vset.pattern.permute.xlu0 0
    %231 = vperm.xlu0 %230, %v220
    %v232 = vpop.permute.xlu0 %231
    %233 = vset.pattern.permute.xlu0 0
    %234 = vperm.xlu0 %233, %v221
    %v235 = vpop.permute.xlu0 %234
    %236 = vset.pattern.permute.xlu0 0
    %237 = vperm.xlu0 %236, %v222
    %v238 = vpop.permute.xlu0 %237
    %239 = vset.pattern.permute.xlu0 0
    %240 = vperm.xlu0 %239, %v223
    %v241 = vpop.permute.xlu0 %240
    %242 = vset.pattern.permute.xlu0 0
    %243 = vperm.xlu0 %242, %v224
    %v244 = vpop.permute.xlu0 %243
    %245 = vset.pattern.permute.xlu0 0
    %246 = vperm.xlu0 %245, %v225
    %v247 = vpop.permute.xlu0 %246
    %248 = vset.pattern.permute.xlu0 0
    %249 = vperm.xlu0 %248, %v226
    %v250 = vpop.permute.xlu0 %249
    %vm251 = vcmp.eq.s32.totalorder %v218, %v229
    %vm252 = vcmp.eq.s32.totalorder %v218, %v232
    %vm253 = vcmp.eq.s32.totalorder %v218, %v235
    %vm254 = vcmp.eq.s32.totalorder %v218, %v238
    %vm255 = vcmp.eq.s32.totalorder %v218, %v241
    %vm256 = vcmp.eq.s32.totalorder %v218, %v244
    %vm257 = vcmp.eq.s32.totalorder %v218, %v247
    %vm258 = vcmp.eq.s32.totalorder %v218, %v250
    %v259 = vsel %vm251, %v179, -inf
    %v260 = vsel %vm252, %v184, -inf
    %v261 = vsel %vm253, %v189, -inf
    %v262 = vsel %vm254, %v194, -inf
    %v263 = vsel %vm255, %v199, -inf
    %v264 = vsel %vm256, %v204, -inf
    %v265 = vsel %vm257, %v209, -inf
    %v266 = vsel %vm258, %v214, -inf
    %vm267 = vcmask 130048
    %v268 = vsel %vm267, %v259, -inf
    %269 = vmax.xlane.f32.xlu0 %v268
    %v270 = vpop.xlane.xlu0 %269
    %v271 = vsel %vm267, %v260, -inf
    %272 = vmax.xlane.f32.xlu0 %v271
    %v273 = vpop.xlane.xlu0 %272
    %v274 = vsel %vm267, %v261, -inf
    %275 = vmax.xlane.f32.xlu0 %v274
    %v276 = vpop.xlane.xlu0 %275
    %v277 = vsel %vm267, %v262, -inf
    %278 = vmax.xlane.f32.xlu0 %v277
    %v279 = vpop.xlane.xlu0 %278
    %v280 = vsel %vm267, %v263, -inf
    %281 = vmax.xlane.f32.xlu0 %v280
    %v282 = vpop.xlane.xlu0 %281
    %v283 = vsel %vm267, %v264, -inf
    %284 = vmax.xlane.f32.xlu0 %v283
    %v285 = vpop.xlane.xlu0 %284
    %v286 = vsel %vm267, %v265, -inf
    %287 = vmax.xlane.f32.xlu0 %v286
    %v288 = vpop.xlane.xlu0 %287
    %v289 = vsel %vm267, %v266, -inf
    %290 = vmax.xlane.f32.xlu0 %v289
    %v291 = vpop.xlane.xlu0 %290
    %vm292 = vcmp.gt.f32.partialorder %v179, %v270
    %vm293 = vcmp.gt.f32.partialorder %v184, %v273
    %vm294 = vcmp.gt.f32.partialorder %v189, %v276
    %vm295 = vcmp.gt.f32.partialorder %v194, %v279
    %vm296 = vcmp.gt.f32.partialorder %v199, %v282
    %vm297 = vcmp.gt.f32.partialorder %v204, %v285
    %vm298 = vcmp.gt.f32.partialorder %v209, %v288
    %vm299 = vcmp.gt.f32.partialorder %v214, %v291
    %v300 = vsel %vm292, 1, 0
    %v301 = vsel %vm293, 1, 0
    %v302 = vsel %vm294, 1, 0
    %v303 = vsel %vm295, 1, 0
    %v304 = vsel %vm296, 1, 0
    %v305 = vsel %vm297, 1, 0
    %v306 = vsel %vm298, 1, 0
    %v307 = vsel %vm299, 1, 0
    %v308 = vsel %vm267, %v300, 0
    %v309 = vand.u32 %v308, 65535
    %v310 = vshrl.u32 %v308, 16
    %v311 = vcvt.s32.f32 %v309
    %v312 = vcvt.s32.f32 %v310
    %313 = vadd.xlane.f32.xlu0 %v311
    %v314 = vpop.xlane.xlu0 %313
    %315 = vadd.xlane.f32.xlu0 %v312
    %v316 = vpop.xlane.xlu0 %315
    %v317 = vcvt.f32.s32 %v314
    %v318 = vcvt.f32.s32 %v316
    %v319 = vshll.u32 %v318, 16
    %v320 = vadd.s32 %v319, %v317
    %v321 = vsel %vm267, %v301, 0
    %v322 = vand.u32 %v321, 65535
    %v323 = vshrl.u32 %v321, 16
    %v324 = vcvt.s32.f32 %v322
    %v325 = vcvt.s32.f32 %v323
    %326 = vadd.xlane.f32.xlu0 %v324
    %v327 = vpop.xlane.xlu0 %326
    %328 = vadd.xlane.f32.xlu0 %v325
    %v329 = vpop.xlane.xlu0 %328
    %v330 = vcvt.f32.s32 %v327
    %v331 = vcvt.f32.s32 %v329
    %v332 = vshll.u32 %v331, 16
    %v333 = vadd.s32 %v332, %v330
    %v334 = vsel %vm267, %v302, 0
    %v335 = vand.u32 %v334, 65535
    %v336 = vshrl.u32 %v334, 16
    %v337 = vcvt.s32.f32 %v335
    %v338 = vcvt.s32.f32 %v336
    %339 = vadd.xlane.f32.xlu0 %v337
    %v340 = vpop.xlane.xlu0 %339
    %341 = vadd.xlane.f32.xlu0 %v338
    %v342 = vpop.xlane.xlu0 %341
    %v343 = vcvt.f32.s32 %v340
    %v344 = vcvt.f32.s32 %v342
    %v345 = vshll.u32 %v344, 16
    %v346 = vadd.s32 %v345, %v343
    %v347 = vsel %vm267, %v303, 0
    %v348 = vand.u32 %v347, 65535
    %v349 = vshrl.u32 %v347, 16
    %v350 = vcvt.s32.f32 %v348
    %v351 = vcvt.s32.f32 %v349
    %352 = vadd.xlane.f32.xlu0 %v350
    %v353 = vpop.xlane.xlu0 %352
    %354 = vadd.xlane.f32.xlu0 %v351
    %v355 = vpop.xlane.xlu0 %354
    %v356 = vcvt.f32.s32 %v353
    %v357 = vcvt.f32.s32 %v355
    %v358 = vshll.u32 %v357, 16
    %v359 = vadd.s32 %v358, %v356
    %v360 = vsel %vm267, %v304, 0
    %v361 = vand.u32 %v360, 65535
    %v362 = vshrl.u32 %v360, 16
    %v363 = vcvt.s32.f32 %v361
    %v364 = vcvt.s32.f32 %v362
    %365 = vadd.xlane.f32.xlu0 %v363
    %v366 = vpop.xlane.xlu0 %365
    %367 = vadd.xlane.f32.xlu0 %v364
    %v368 = vpop.xlane.xlu0 %367
    %v369 = vcvt.f32.s32 %v366
    %v370 = vcvt.f32.s32 %v368
    %v371 = vshll.u32 %v370, 16
    %v372 = vadd.s32 %v371, %v369
    %v373 = vsel %vm267, %v305, 0
    %v374 = vand.u32 %v373, 65535
    %v375 = vshrl.u32 %v373, 16
    %v376 = vcvt.s32.f32 %v374
    %v377 = vcvt.s32.f32 %v375
    %378 = vadd.xlane.f32.xlu0 %v376
    %v379 = vpop.xlane.xlu0 %378
    %380 = vadd.xlane.f32.xlu0 %v377
    %v381 = vpop.xlane.xlu0 %380
    %v382 = vcvt.f32.s32 %v379
    %v383 = vcvt.f32.s32 %v381
    %v384 = vshll.u32 %v383, 16
    %v385 = vadd.s32 %v384, %v382
    %v386 = vsel %vm267, %v306, 0
    %v387 = vand.u32 %v386, 65535
    %v388 = vshrl.u32 %v386, 16
    %v389 = vcvt.s32.f32 %v387
    %v390 = vcvt.s32.f32 %v388
    %391 = vadd.xlane.f32.xlu0 %v389
    %v392 = vpop.xlane.xlu0 %391
    %393 = vadd.xlane.f32.xlu0 %v390
    %v394 = vpop.xlane.xlu0 %393
    %v395 = vcvt.f32.s32 %v392
    %v396 = vcvt.f32.s32 %v394
    %v397 = vshll.u32 %v396, 16
    %v398 = vadd.s32 %v397, %v395
    %v399 = vsel %vm267, %v307, 0
    %v400 = vand.u32 %v399, 65535
    %v401 = vshrl.u32 %v399, 16
    %v402 = vcvt.s32.f32 %v400
    %v403 = vcvt.s32.f32 %v401
    %404 = vadd.xlane.f32.xlu0 %v402
    %v405 = vpop.xlane.xlu0 %404
    %406 = vadd.xlane.f32.xlu0 %v403
    %v407 = vpop.xlane.xlu0 %406
    %v408 = vcvt.f32.s32 %v405
    %v409 = vcvt.f32.s32 %v407
    %v410 = vshll.u32 %v409, 16
    %v411 = vadd.s32 %v410, %v408
    %vm412 = vcmp.lt.s32.totalorder %v320, 1
    %vm413 = vcmp.lt.s32.totalorder %v333, 1
    %vm414 = vcmp.lt.s32.totalorder %v346, 1
    %vm415 = vcmp.lt.s32.totalorder %v359, 1
    %vm416 = vcmp.lt.s32.totalorder %v372, 1
    %vm417 = vcmp.lt.s32.totalorder %v385, 1
    %vm418 = vcmp.lt.s32.totalorder %v398, 1
    %vm419 = vcmp.lt.s32.totalorder %v411, 1
    %v420 = vsel %vm412, 1, 0
    %v421 = vsel %vm413, 1, 0
    %v422 = vsel %vm414, 1, 0
    %v423 = vsel %vm415, 1, 0
    %v424 = vsel %vm416, 1, 0
    %v425 = vsel %vm417, 1, 0
    %v426 = vsel %vm418, 1, 0
    %v427 = vsel %vm419, 1, 0
    %v428 = vcvt.s32.f32 %v420
    %v429 = vcvt.s32.f32 %v421
    %v430 = vcvt.s32.f32 %v422
    %v431 = vcvt.s32.f32 %v423
    %v432 = vcvt.s32.f32 %v424
    %v433 = vcvt.s32.f32 %v425
    %v434 = vcvt.s32.f32 %v426
    %v435 = vcvt.s32.f32 %v427
    %v436 = vld [vmem:[#allocation2] sm:$0x1]
    %vm437 = vcmask 7168
    %v438 = vsel %vm437, %v428, 0.0
    %v439 = vsel %vm437, %v429, 0.0
    %v440 = vadd.f32 %v438, %v439
    %v441 = vsel %vm437, %v430, 0.0
    %v442 = vadd.f32 %v440, %v441
    %v443 = vsel %vm437, %v431, 0.0
    %v444 = vadd.f32 %v442, %v443
    %v445 = vsel %vm437, %v432, 0.0
    %v446 = vadd.f32 %v444, %v445
    %v447 = vsel %vm437, %v433, 0.0
    %v448 = vadd.f32 %v446, %v447
    %v449 = vsel %vm437, %v434, 0.0
    %v450 = vadd.f32 %v448, %v449
    %v451 = vsel %vm437, %v435, 0.0
    %v452 = vadd.f32 %v450, %v451
    %453 = vadd.xlane.f32.xlu0 %v452
    %v454 = vpop.xlane.xlu0 %453
    %v455 = vrot.slane %v454, 4
    %v456 = vadd.f32 %v454, %v455
    %v457 = vrot.slane %v456, 2
    %v458 = vadd.f32 %v456, %v457
    %v459 = vrot.slane %v458, 1
    %v460 = vadd.f32 %v458, %v459
    %s461 = vtos %v460
    %v462 = vstv %s461
    %v463 = vadd.f32 %v436, %v462
    %vm464 = vcmask 0
    %465 = vst.msk [vmem:[#allocation2] sm:$0x1] %vm464, %v463
    // Predicated region
    $region22: #{tpu_custom_call.1} parent=1 // pred_check
      %p466 = pneg %p62
    $region23: #{tpu_custom_call.1} parent=1 // pred_check_branch
      %468 = sbr.rel (%p466) target = $region25
    $region24: #{tpu_custom_call.1} parent=1 // pred_region
      %v469 = vld [vmem:[#allocation2] sm:$0x1]
      %v470 = vadd.f32 %v469, 0.0
      %s471 = vtos %v470
      %v472 = vstv %s471
      %473 = vst [vmem:[#allocation3] sm:$0xff] %v472
    $region25: #{tpu_custom_call.1} parent=1 // pred_fallthru
      _
    // Predicated region
    $region26: #{tpu_custom_call.1} parent=1 // pred_check
      _
    $region27: #{tpu_custom_call.1} parent=1 // pred_check_branch
      %475 = sbr.rel (0) target = $region29
    $region28: #{tpu_custom_call.1} parent=1 // pred_region
      %s477 = ssub.s32 128, 128
      %478 = vsyncadd [#allocation4], %s477
      %s480 = sshll.u32 [#allocation3], 4
      %s481 = int_to_ptr.vmem [resolvable:$true] %s480
      %483 = dma.vmem_to_hbm [thread:$0]  %s481, 128, %s4, [#allocation4]
    $region29: #{tpu_custom_call.1} parent=1 // pred_fallthru
      _
    // Predicated region
    $region30: #{tpu_custom_call.1} parent=1 // pred_check
      _
    $region31: #{tpu_custom_call.1} parent=1 // pred_check_branch
      %485 = sbr.rel (0) target = $region33
    $region32: #{tpu_custom_call.1} parent=1 // pred_region
      %486 = dma.done [#allocation4], 128
    $region33: #{tpu_custom_call.1} parent=1 // pred_fallthru
      _
    %487 = vsyncpa [#allocation4], 1

</llo_original>
